<compile_context>
chip_gen: v7x
topology: tpu7x:2x2x1
jax: 0.10.0
libtpu: 0.0.40
codegen_flags: <defaults>
</compile_context>

<pallas_src>
import jax
import jax.numpy as jnp
from jax.experimental import pallas as pl
from jax.experimental.pallas import tpu as pltpu


def my_cell_kernel(x_ref, h_ref, wt_ref, b_ref, out_ref):
    x = x_ref[...]    # [B, F_in]
    h = h_ref[...]    # [B, F_out]
    wt = wt_ref[...]  # [F_in, F_out]  pre-transposed weight (no in-kernel transpose)
    b = b_ref[...]    # [1, F_out]

    # Linear: y = x @ W^T + b   (single small MXU pass)
    y = jnp.dot(x, wt, preferred_element_type=jnp.float32) + b

    # MyDecisionGate: flip sign iff sum(y) <= 0 (matches torch `if x.sum() > 0: x else: -x`,
    # i.e. an exact zero sum flips the sign).  No mask needed: there is no padding.
    total = jnp.sum(y)
    sign = jnp.where(total > 0.0, 1.0, -1.0)  # scalar select; -y never materialized

    # new_h = tanh(sign * y + h)   (tanh runs on the EUP slot)
    out_ref[...] = jnp.tanh(sign * y + h).astype(out_ref.dtype)


def make_my_cell(w, b):
    """Bind nn.Linear params once. w: [F_out, F_in] (torch layout); b: [F_out].

    Returns a jitted step(x, h) -> (new_h, new_h).  W^T and the 2-D bias are prepared here,
    once, and captured as jit constants -- nothing is re-padded / re-transposed per call.
    """
    wt = jnp.asarray(w, jnp.float32).T                 # [F_in, F_out]
    b2 = jnp.asarray(b, jnp.float32).reshape(1, -1)    # [1, F_out]
    f_out = wt.shape[1]

    @jax.jit
    def step(x, h):
        out = pl.pallas_call(
            my_cell_kernel,
            out_shape=jax.ShapeDtypeStruct((x.shape[0], f_out), x.dtype),
            in_specs=[pl.BlockSpec(memory_space=pltpu.MemorySpace.VMEM)] * 4,
            out_specs=pl.BlockSpec(memory_space=pltpu.MemorySpace.VMEM),
        )(x, h, wt, b2)
        # MyCell.forward returns (new_h, new_h)
        return out, out

    return step


if __name__ == "__main__":
    key = jax.random.PRNGKey(0)
    kx, kh, kw, kb = jax.random.split(key, 4)

    B, F = 3, 4  # shapes implied by torch.rand(3, 4) and nn.Linear(4, 4)
    x = jax.random.uniform(kx, (B, F), dtype=jnp.float32)
    h = jax.random.uniform(kh, (B, F), dtype=jnp.float32)

    # Deterministic synthetic params, mimicking nn.Linear U(-1/sqrt(in), 1/sqrt(in))
    bound = 1.0 / (F ** 0.5)
    w = jax.random.uniform(kw, (F, F), dtype=jnp.float32, minval=-bound, maxval=bound)
    b = jax.random.uniform(kb, (F,), dtype=jnp.float32, minval=-bound, maxval=bound)

    my_cell = make_my_cell(w, b)
    new_h, new_h2 = my_cell(x, h)
    jax.block_until_ready(new_h)

    # Pure-JAX reference check
    y_ref = x @ w.T + b
    y_ref = jnp.where(jnp.sum(y_ref) > 0, y_ref, -y_ref)
    ref = jnp.tanh(y_ref + h)
    assert new_h.shape == (B, F), "wrong output shape"
    assert jnp.allclose(new_h, ref, atol=1e-5), "mismatch vs reference"
    assert jnp.allclose(new_h2, ref, atol=1e-5), "second output mismatch"

    print("KERNEL_OK")
</pallas_src>

<mosaic_0001>
module attributes {stable_mosaic.version = 11 : i64} {
  func.func @my_cell_kernel(%arg0: memref<3x4xf32, #tpu.memory_space<vmem>>, %arg1: memref<3x4xf32, #tpu.memory_space<vmem>>, %arg2: memref<4x4xf32, #tpu.memory_space<vmem>>, %arg3: memref<1x4xf32, #tpu.memory_space<vmem>>, %arg4: memref<3x4xf32, #tpu.memory_space<vmem>>) attributes {dimension_semantics = [], scalar_prefetch = 0 : i64, scratch_operands = 0 : i64, tpu.core_type = #tpu.core_type<tc>} {
    %c0 = arith.constant 0 : index
    %c0_0 = arith.constant 0 : index
    %0 = vector.load %arg0[%c0, %c0_0] : memref<3x4xf32, #tpu.memory_space<vmem>>, vector<3x4xf32>
    %c0_1 = arith.constant 0 : index
    %c0_2 = arith.constant 0 : index
    %1 = vector.load %arg1[%c0_1, %c0_2] : memref<3x4xf32, #tpu.memory_space<vmem>>, vector<3x4xf32>
    %c0_3 = arith.constant 0 : index
    %c0_4 = arith.constant 0 : index
    %2 = vector.load %arg2[%c0_3, %c0_4] : memref<4x4xf32, #tpu.memory_space<vmem>>, vector<4x4xf32>
    %c0_5 = arith.constant 0 : index
    %c0_6 = arith.constant 0 : index
    %3 = vector.load %arg3[%c0_5, %c0_6] : memref<1x4xf32, #tpu.memory_space<vmem>>, vector<1x4xf32>
    %cst = arith.constant dense<0.000000e+00> : vector<3x4xf32>
    %4 = tpu.matmul %0, %2, %cst {dimension_numbers = #tpu.dot_dimension_numbers<[1], [0], [0], [1], [0, 0, 1, 1], [], []>} : vector<3x4xf32>, vector<4x4xf32>, vector<3x4xf32> -> vector<3x4xf32>
    %5 = vector.broadcast %3 : vector<1x4xf32> to vector<3x4xf32>
    %6 = arith.addf %4, %5 : vector<3x4xf32>
    %7 = vector.shape_cast %6 : vector<3x4xf32> to vector<1x3x4xf32>
    %cst_7 = arith.constant dense<0.000000e+00> : vector<1xf32>
    %8 = vector.multi_reduction <add>, %7, %cst_7 [1, 2] : vector<1x3x4xf32> to vector<1xf32>
    %9 = vector.shape_cast %8 : vector<1xf32> to vector<1x1x1xf32>
    %10 = vector.extract %9[0, 0, 0] : f32 from vector<1x1x1xf32>
    %cst_8 = arith.constant 0.000000e+00 : f32
    %11 = arith.cmpf ogt, %10, %cst_8 : f32
    %cst_9 = arith.constant 1.000000e+00 : f32
    %cst_10 = arith.constant -1.000000e+00 : f32
    %12 = arith.select %11, %cst_9, %cst_10 : f32
    %13 = vector.broadcast %12 : f32 to vector<3x4xf32>
    %14 = arith.mulf %13, %6 : vector<3x4xf32>
    %15 = arith.addf %14, %1 : vector<3x4xf32>
    %16 = math.tanh %15 : vector<3x4xf32>
    %c0_11 = arith.constant 0 : index
    %c0_12 = arith.constant 0 : index
    %17 = vector.load %arg4[%c0_11, %c0_12] : memref<3x4xf32, #tpu.memory_space<vmem>>, vector<3x4xf32>
    tpu.vector_store %arg4[%c0_11, %c0_12], %16 {strides = array<i32>} : memref<3x4xf32, #tpu.memory_space<vmem>>, vector<3x4xf32>,
    return
  }
}

</mosaic_0001>

<llo_original>
// kernel: step.1
$region0: #{step.1}
  #allocation0 [shape = 'u32[]', space=smem, size = 0x4, offset = 0x4, fixed_abs, tag = 'smem constant byte address 0x4 - core index']
  #allocation1 [shape = 'u32[144,128]{1,0:T(1,128)}', space=vmem, size = 0x12000, scoped, tag = 'internal scratch']
  %s0 = inlined_call_operand.hbm [shape: f32[3,4], index: 0, kind: input, shape index: {}]
  %s1 = inlined_call_operand.hbm [shape: f32[3,4], index: 1, kind: input, shape index: {}]
  %s2 = inlined_call_operand.vmem [shape: f32[4,4], index: 2, kind: input, shape index: {}]
  %s3 = inlined_call_operand.vmem [shape: f32[1,4], index: 3, kind: input, shape index: {}]
  %s4 = inlined_call_operand.vmem [shape: f32[3,4], index: 4, kind: output, shape index: {}]
  %s5 = sld [smem:[#allocation0]]
  $region34: #{step.1} parent=0
    _
  %s7 = ssub.s32 1, %s5
  %s8 = scalar_select 0, %s7, %s5
  $region1: #{step.1} parent=0
    #allocation2 [shape = 'u8[2048]{0}', space=vmem, size = 0x800, scoped, tag = 'input window, operand 0, single buffered']
    #allocation3 [shape = 's32[1]{0}', space=sflag, size = 0x4, scoped, tag = 'scoped memory for step.1']
    #allocation4 [shape = 'u8[2048]{0}', space=vmem, size = 0x800, scoped, tag = 'input window, operand 1, single buffered']
    #allocation5 [shape = 's32[1]{0}', space=sflag, size = 0x4, scoped, tag = 'scoped memory for step.1']
    %9 = vsyncpa [#allocation3], 0
    %10 = vsyncpa [#allocation5], 0
    // Predicated region
    $region2: #{step.1} parent=1 // pred_check
      _
    $region3: #{step.1} parent=1 // pred_check_branch
      %12 = sbr.rel (0) target = $region5
    $region4: #{step.1} parent=1 // pred_region
      %s14 = ssub.s32 64, 64
      %15 = vsyncadd [#allocation3], %s14
      %s17 = sshll.u32 [#allocation2], 4
      %s18 = int_to_ptr.vmem [resolvable:$true] %s17
      %20 = dma.hbm_to_vmem [thread:$0]  %s0, 64, %s18, [#allocation3]
    $region5: #{step.1} parent=1 // pred_fallthru
      _
    // Predicated region
    $region6: #{step.1} parent=1 // pred_check
      _
    $region7: #{step.1} parent=1 // pred_check_branch
      %22 = sbr.rel (0) target = $region9
    $region8: #{step.1} parent=1 // pred_region
      %s24 = ssub.s32 64, 64
      %25 = vsyncadd [#allocation5], %s24
      %s27 = sshll.u32 [#allocation4], 4
      %s28 = int_to_ptr.vmem [resolvable:$true] %s27
      %30 = dma.hbm_to_vmem [thread:$0]  %s1, 64, %s28, [#allocation5]
    $region9: #{step.1} parent=1 // pred_fallthru
      _
    // Predicated region
    $region10: #{step.1} parent=1 // pred_check
      _
    $region11: #{step.1} parent=1 // pred_check_branch
      %32 = sbr.rel (0) target = $region13
    $region12: #{step.1} parent=1 // pred_region
      _
    $region13: #{step.1} parent=1 // pred_fallthru
      _
    // Predicated region
    $region14: #{step.1} parent=1 // pred_check
      _
    $region15: #{step.1} parent=1 // pred_check_branch
      %34 = sbr.rel (0) target = $region17
    $region16: #{step.1} parent=1 // pred_region
      _
    $region17: #{step.1} parent=1 // pred_fallthru
      _
    // Predicated region
    $region18: #{step.1} parent=1 // pred_check
      _
    $region19: #{step.1} parent=1 // pred_check_branch
      %36 = sbr.rel (0) target = $region21
    $region20: #{step.1} parent=1 // pred_region
      %37 = dma.done [#allocation3], 64
    $region21: #{step.1} parent=1 // pred_fallthru
      _
    // Predicated region
    $region22: #{step.1} parent=1 // pred_check
      _
    $region23: #{step.1} parent=1 // pred_check_branch
      %39 = sbr.rel (0) target = $region25
    $region24: #{step.1} parent=1 // pred_region
      %40 = dma.done [#allocation5], 64
    $region25: #{step.1} parent=1 // pred_fallthru
      _
    %v41 = vld [vmem:[#allocation2] sm:$0x7]
    %v42 = vld [vmem:[#allocation4] sm:$0x7]
    %v43 = vld [vmem:[%s2] sm:$0xf]
    %v44 = vld [vmem:[%s3] sm:$0x1]
    %v46 = vlaneseq
    %v47 = vshrl.u32 %v46, 7
    %v48 = vsub.s32 0, %v47
    %v49 = vrot.slane %v44, %v48
    %vm51 = vcmask 31744
    %v53 = vsel %vm51, %v41, 0
    %vm55 = vcmask 1043456
    %v57 = vsel %vm55, %v43, 0
    %59 = vmatprep.subr.mxu0 0.0
    %60 = vmatpush1.msra.mxu0 %v57
    %61 = vmatprep.subr.mxu0 0.0
    %62 = vmatpush1.msra.mxu0 0.0
    %63 = vmatprep.subr.mxu0 0.0
    %64 = vmatpush1.msra.mxu0 0.0
    %65 = vmatprep.subr.mxu0 0.0
    %66 = vmatpush1.msra.mxu0 0.0
    %67 = vmatprep.subr.mxu0 0.0
    %68 = vmatpush1.msra.mxu0 0.0
    %69 = vmatprep.subr.mxu0 0.0
    %70 = vmatpush1.msra.mxu0 0.0
    %71 = vmatprep.subr.mxu0 0.0
    %72 = vmatpush1.msra.mxu0 0.0
    %73 = vmatprep.subr.mxu0 0.0
    %74 = vmatpush1.msra.mxu0 0.0
    %75 = vmatprep.subr.mxu0 0.0
    %76 = vmatpush1.msra.mxu0 0.0
    %77 = vmatprep.subr.mxu0 0.0
    %78 = vmatpush1.msra.mxu0 0.0
    %79 = vmatprep.subr.mxu0 0.0
    %80 = vmatpush1.msra.mxu0 0.0
    %81 = vmatprep.subr.mxu0 0.0
    %82 = vmatpush1.msra.mxu0 0.0
    %83 = vmatprep.subr.mxu0 0.0
    %84 = vmatpush1.msra.mxu0 0.0
    %85 = vmatprep.subr.mxu0 0.0
    %86 = vmatpush1.msra.mxu0 0.0
    %87 = vmatprep.subr.mxu0 0.0
    %88 = vmatpush1.msra.mxu0 0.0
    %89 = vmatprep.subr.mxu0 0.0
    %90 = vmatpush1.msra.mxu0 0.0
    %91 = vmatprep.subr.mxu0 0.0
    %92 = vmatpush1.msra.mxu0 0.0
    %93 = vmatprep.subr.mxu0 0.0
    %94 = vmatpush1.msra.mxu0 0.0
    %95 = vmatprep.subr.mxu0 0.0
    %96 = vmatpush1.msra.mxu0 0.0
    %97 = vmatprep.subr.mxu0 0.0
    %98 = vmatpush1.msra.mxu0 0.0
    %99 = vmatprep.subr.mxu0 0.0
    %100 = vmatpush1.msra.mxu0 0.0
    %101 = vmatprep.subr.mxu0 0.0
    %102 = vmatpush1.msra.mxu0 0.0
    %103 = vmatprep.subr.mxu0 0.0
    %104 = vmatpush1.msra.mxu0 0.0
    %105 = vmatprep.subr.mxu0 0.0
    %106 = vmatpush1.msra.mxu0 0.0
    %107 = vmatprep.subr.mxu0 0.0
    %108 = vmatpush1.msra.mxu0 0.0
    %109 = vmatprep.subr.mxu0 0.0
    %110 = vmatpush1.msra.mxu0 0.0
    %111 = vmatprep.subr.mxu0 0.0
    %112 = vmatpush1.msra.mxu0 0.0
    %113 = vmatprep.subr.mxu0 0.0
    %114 = vmatpush1.msra.mxu0 0.0
    %115 = vmatprep.subr.mxu0 0.0
    %116 = vmatpush1.msra.mxu0 0.0
    %117 = vmatprep.subr.mxu0 0.0
    %118 = vmatpush1.msra.mxu0 0.0
    %119 = vmatprep.subr.mxu0 0.0
    %120 = vmatpush1.msra.mxu0 0.0
    %121 = vmatprep.subr.mxu0 0.0
    %122 = vmatpush1.msra.mxu0 0.0
    %123 = vmatprep.mubr.f32.mxu0 0.0
    %124 = vmatmul.mubr.f32.gmra.mrb[0].mxu0 %v53
    %v125 = vpop.f32.mrb[0].mxu0
    %v126 = vadd.f32 %v49, %v125
    %v127 = vpop.f32.mrb[0].mxu0
    %128 = vdwg.mxu0
    %vm129 = vcmask 26624
    %v130 = vsel %vm129, %v126, 0.0
    %131 = vadd.xlane.f32.xlu0 %v130
    %v132 = vpop.xlane.xlu0 %131
    %v133 = vrot.slane %v132, 4
    %v134 = vadd.f32 %v132, %v133
    %v135 = vrot.slane %v134, 2
    %v136 = vadd.f32 %v134, %v135
    %v137 = vrot.slane %v136, 1
    %v138 = vadd.f32 %v136, %v137
    %s139 = vtos %v138
    %p140 = scmp.gt.f32.partialorder %s139, 0.0
    %s141 = scalar_select %p140, 1.0, -1.0
    %v142 = vstv %s141
    %v143 = vmul.f32 %v142, %v126
    %v144 = vadd.f32 %v143, %v42
    %v145 = vtanh.pop %v144
    %146 = vst.msk [vmem:[%s4] sm:$0x7] %vm129, %v145
    // Predicated region
    $region26: #{step.1} parent=1 // pred_check
      _
    $region27: #{step.1} parent=1 // pred_check_branch
      %148 = sbr.rel (0) target = $region29
    $region28: #{step.1} parent=1 // pred_region
      _
    $region29: #{step.1} parent=1 // pred_fallthru
      _
    // Predicated region
    $region30: #{step.1} parent=1 // pred_check
      _
    $region31: #{step.1} parent=1 // pred_check_branch
      %150 = sbr.rel (0) target = $region33
    $region32: #{step.1} parent=1 // pred_region
      _
    $region33: #{step.1} parent=1 // pred_fallthru
      _
    %151 = vsyncpa [#allocation3], 1
    %152 = vsyncpa [#allocation5], 1

</llo_original>
